<compile_context>
chip_gen: v6e
topology: v6e:2x2x1
jax: 0.10.0
libtpu: 0.0.40
codegen_flags: <defaults>
</compile_context>

<pallas_src>
import functools

import jax
import jax.numpy as jnp
from jax.experimental import pallas as pl
from jax.experimental.pallas import tpu as pltpu

LANE = 128
SUBLANE = 8


def _round_up(n, m):
    return ((n + m - 1) // m) * m


def mlp_kernel(x_ref, w1_ref, w2_ref, w3_ref, b_ref, o_ref, *, h1_p, h2_p, d_out):
    # x_ref: (TB, d_in) f32 (raw, unpadded columns); w*: bf16; b_ref: (8, BW) f32.
    x = x_ref[...].astype(jnp.bfloat16)          # cast in-kernel, hidden under DMA
    b = b_ref[...]
    b1 = b[0:1, :h1_p]
    b2 = b[1:2, :h2_p]
    b3 = b[2:3, :d_out]

    # layer1: Linear + ReLU   (bf16 MXU, f32 accumulate, f32 elementwise)
    h1 = jnp.dot(x, w1_ref[...], preferred_element_type=jnp.float32)
    h1 = jnp.maximum(h1 + b1, 0.0)
    # layer2: Linear + ReLU
    h2 = jnp.dot(h1.astype(jnp.bfloat16), w2_ref[...], preferred_element_type=jnp.float32)
    h2 = jnp.maximum(h2 + b2, 0.0)
    # layer3: Linear (no activation) -> only the real d_out columns are produced/stored
    out = jnp.dot(h2.astype(jnp.bfloat16), w3_ref[...], preferred_element_type=jnp.float32)
    o_ref[...] = (out + b3).astype(o_ref.dtype)


def prepare_params(params):
    """One-time padding/casting of weights & biases (hoisted out of the per-call path)."""
    w1, b1, w2, b2, w3, b3 = params
    d_in, h1d = w1.shape
    h2d = w2.shape[1]
    d_out = w3.shape[1]

    h1_p = _round_up(h1d, LANE)
    h2_p = _round_up(h2d, LANE)
    bw = max(h1_p, h2_p, _round_up(d_out, LANE))

    bf16 = jnp.bfloat16
    # Zero padding on hidden dims keeps padded hidden columns exactly zero through
    # bias-add (padded bias = 0) and ReLU, so they contribute nothing downstream.
    w1_p = jnp.zeros((d_in, h1_p), bf16).at[:, :h1d].set(w1.astype(bf16))
    w2_p = jnp.zeros((h1_p, h2_p), bf16).at[:h1d, :h2d].set(w2.astype(bf16))
    w3_p = jnp.zeros((h2_p, d_out), bf16).at[:h2d, :].set(w3.astype(bf16))
    b_all = (
        jnp.zeros((SUBLANE, bw), jnp.float32)
        .at[0, :h1d].set(b1.reshape(-1))
        .at[1, :h2d].set(b2.reshape(-1))
        .at[2, :d_out].set(b3.reshape(-1))
    )
    dims = (d_in, d_out, h1_p, h2_p, bw)
    return (w1_p, w2_p, w3_p, b_all, dims)


def net_forward(x, prepared, *, max_tile_rows=2048):
    """Fused 3-layer MLP forward in one Pallas call with a batch-tiled 1-D grid."""
    w1_p, w2_p, w3_p, b_all, (d_in, d_out, h1_p, h2_p, bw) = prepared
    B = x.shape[0]
    assert x.shape[1] == d_in

    # Batch-tile selection:
    #   - at least cdiv(B, max_tile_rows) tiles to bound VMEM,
    #   - 2 tiles for medium/large batches so v7x megacore gets both TCs busy,
    #   - 1 tile for small batches (per-step overhead would dominate),
    #   - keep tile count even when >1 for a balanced 2-TC split.
    num_tiles = max(pl.cdiv(B, max_tile_rows), 2 if B >= 256 else 1)
    if num_tiles > 1 and num_tiles % 2 == 1:
        num_tiles += 1
    if num_tiles == 1:
        TB = B                                    # full-dim block: no sublane constraint
    else:
        TB = _round_up(pl.cdiv(B, num_tiles), SUBLANE)
    B_p = num_tiles * TB

    # Only row padding (d_in columns, f32) when the batch doesn't split evenly: tiny.
    x_in = x if B_p == B else jnp.zeros((B_p, d_in), x.dtype).at[:B].set(x)

    # VMEM budget (double-buffered x/out tiles, resident weights/bias, f32 temporaries).
    vmem_bytes = (
        2 * TB * d_in * 4                                   # x tile (f32)
        + 2 * TB * d_out * 4                                # out tile (f32)
        + 2 * (d_in * h1_p + h1_p * h2_p + h2_p * d_out) * 2  # bf16 weights
        + SUBLANE * bw * 4                                  # packed biases
        + 2 * TB * (h1_p + h2_p) * 4                        # f32 h1/h2 + bf16 copies
    )
    vmem_limit = int(min(max(vmem_bytes * 2, 4 * 1024 * 1024), 64 * 1024 * 1024))

    kernel = functools.partial(mlp_kernel, h1_p=h1_p, h2_p=h2_p, d_out=d_out)

    out = pl.pallas_call(
        kernel,
        out_shape=jax.ShapeDtypeStruct((B_p, d_out), jnp.float32),
        grid_spec=pl.GridSpec(
            grid=(num_tiles,),
            in_specs=[
                pl.BlockSpec((TB, d_in), lambda i: (i, 0)),     # x: streamed per tile (raw f32)
                pl.BlockSpec((d_in, h1_p), lambda i: (0, 0)),   # W1: VMEM-resident
                pl.BlockSpec((h1_p, h2_p), lambda i: (0, 0)),   # W2: VMEM-resident
                pl.BlockSpec((h2_p, d_out), lambda i: (0, 0)),  # W3: VMEM-resident
                pl.BlockSpec((SUBLANE, bw), lambda i: (0, 0)),  # packed biases
            ],
            out_specs=pl.BlockSpec((TB, d_out), lambda i: (i, 0)),  # only real columns written
        ),
        compiler_params=pltpu.CompilerParams(
            dimension_semantics=("parallel",),
            vmem_limit_bytes=vmem_limit,
        ),
    )(x_in, w1_p, w2_p, w3_p, b_all)

    return out if B_p == B else out[:B]


def init_linear(key, fan_in, fan_out):
    """Deterministic init mimicking PyTorch nn.Linear default (uniform ±1/sqrt(fan_in))."""
    kw, kb = jax.random.split(key)
    bound = 1.0 / jnp.sqrt(fan_in)
    w = jax.random.uniform(kw, (fan_in, fan_out), jnp.float32, -bound, bound)
    b = jax.random.uniform(kb, (1, fan_out), jnp.float32, -bound, bound)
    return w, b


def reference_forward(x, params):
    w1, b1, w2, b2, w3, b3 = params
    h1 = jnp.maximum(x @ w1 + b1, 0.0)
    h2 = jnp.maximum(h1 @ w2 + b2, 0.0)
    return h2 @ w3 + b3


if __name__ == "__main__":
    # Shapes consistent with the module:
    #   input_size (post one-hot feature count) -> 16
    #   hidden1_size = 32, hidden2_size = 64
    #   output_size -> 8 (module uses y.shape[0]; synthetic choice)
    # TODO(synk): pandas/sklearn preprocessing from the original script is data-prep,
    # not part of the nn.Module forward, and is not reproduced here.
    input_size = 16
    hidden1_size = 32
    hidden2_size = 64
    output_size = 8

    key = jax.random.PRNGKey(0)
    kx, k1, k2, k3, kx2 = jax.random.split(key, 5)

    w1, b1 = init_linear(k1, input_size, hidden1_size)
    w2, b2 = init_linear(k2, hidden1_size, hidden2_size)
    w3, b3 = init_linear(k3, hidden2_size, output_size)
    params = (w1, b1, w2, b2, w3, b3)

    # One-time weight/bias padding + bf16 casts (hoisted out of the forward path).
    prepared = prepare_params(params)

    # --- test 1: small batch (single grid step, B not a multiple of 128) ---
    batch = 8
    x = jax.random.normal(kx, (batch, input_size), jnp.float32)
    out = jax.block_until_ready(net_forward(x, prepared))
    ref = reference_forward(x, params)
    assert out.shape == (batch, output_size)
    # bf16 matmuls with f32 accumulation -> ~1e-2 tolerance vs f32 reference.
    assert jnp.allclose(out, ref, atol=5e-2, rtol=5e-2), "mismatch vs pure-JAX reference (small batch)"

    # --- test 2: larger batch exercising the 2-tile 'parallel' grid + row padding ---
    batch2 = 1100
    x2 = jax.random.normal(kx2, (batch2, input_size), jnp.float32)
    out2 = jax.block_until_ready(net_forward(x2, prepared))
    ref2 = reference_forward(x2, params)
    assert out2.shape == (batch2, output_size)
    assert jnp.allclose(out2, ref2, atol=5e-2, rtol=5e-2), "mismatch vs pure-JAX reference (large batch)"

    print("KERNEL_OK")
</pallas_src>

<mosaic_0001>
module attributes {stable_mosaic.version = 11 : i64} {
  func.func @mlp_kernel(%arg0: i32, %arg1: memref<8x16xf32, #tpu.memory_space<vmem>>, %arg2: memref<16x128xbf16, #tpu.memory_space<vmem>>, %arg3: memref<128x128xbf16, #tpu.memory_space<vmem>>, %arg4: memref<128x8xbf16, #tpu.memory_space<vmem>>, %arg5: memref<8x128xf32, #tpu.memory_space<vmem>>, %arg6: memref<8x8xf32, #tpu.memory_space<vmem>>) attributes {dimension_semantics = [#tpu.dimension_semantics<parallel>], iteration_bounds = array<i64: 1>, scalar_prefetch = 0 : i64, scratch_operands = 0 : i64, tpu.core_type = #tpu.core_type<tc>, window_params = [{transform_indices = @transform_0, window_bounds = array<i64: 8, 16>}, {pipeline_mode = #tpu.pipeline_mode<synchronous>, transform_indices = @transform_1, window_bounds = array<i64: 16, 128>}, {pipeline_mode = #tpu.pipeline_mode<synchronous>, transform_indices = @transform_2, window_bounds = array<i64: 128, 128>}, {pipeline_mode = #tpu.pipeline_mode<synchronous>, transform_indices = @transform_3, window_bounds = array<i64: 128, 8>}, {pipeline_mode = #tpu.pipeline_mode<synchronous>, transform_indices = @transform_4, window_bounds = array<i64: 8, 128>}, {transform_indices = @transform_5, window_bounds = array<i64: 8, 8>}]} {
    %c0 = arith.constant 0 : index
    %c0_0 = arith.constant 0 : index
    %0 = vector.load %arg1[%c0, %c0_0] : memref<8x16xf32, #tpu.memory_space<vmem>>, vector<8x16xf32>
    %1 = arith.truncf %0 : vector<8x16xf32> to vector<8x16xbf16>
    %c0_1 = arith.constant 0 : index
    %c0_2 = arith.constant 0 : index
    %2 = vector.load %arg5[%c0_1, %c0_2] : memref<8x128xf32, #tpu.memory_space<vmem>>, vector<8x128xf32>
    %3 = vector.extract_strided_slice %2 {offsets = [0, 0], sizes = [1, 128], strides = [1, 1]} : vector<8x128xf32> to vector<1x128xf32>
    %4 = vector.extract_strided_slice %2 {offsets = [1, 0], sizes = [1, 128], strides = [1, 1]} : vector<8x128xf32> to vector<1x128xf32>
    %5 = vector.extract_strided_slice %2 {offsets = [2, 0], sizes = [1, 8], strides = [1, 1]} : vector<8x128xf32> to vector<1x8xf32>
    %c0_3 = arith.constant 0 : index
    %c0_4 = arith.constant 0 : index
    %6 = vector.load %arg2[%c0_3, %c0_4] : memref<16x128xbf16, #tpu.memory_space<vmem>>, vector<16x128xbf16>
    %cst = arith.constant dense<0.000000e+00> : vector<8x128xf32>
    %7 = tpu.matmul %1, %6, %cst {dimension_numbers = #tpu.dot_dimension_numbers<[1], [0], [0], [1], [0, 0, 1, 1], [], []>} : vector<8x16xbf16>, vector<16x128xbf16>, vector<8x128xf32> -> vector<8x128xf32>
    %8 = vector.broadcast %3 : vector<1x128xf32> to vector<8x128xf32>
    %9 = arith.addf %7, %8 : vector<8x128xf32>
    %cst_5 = arith.constant 0.000000e+00 : f32
    %10 = vector.broadcast %cst_5 : f32 to vector<8x128xf32>
    %11 = arith.maximumf %9, %10 : vector<8x128xf32>
    %12 = arith.truncf %11 : vector<8x128xf32> to vector<8x128xbf16>
    %c0_6 = arith.constant 0 : index
    %c0_7 = arith.constant 0 : index
    %13 = vector.load %arg3[%c0_6, %c0_7] : memref<128x128xbf16, #tpu.memory_space<vmem>>, vector<128x128xbf16>
    %cst_8 = arith.constant dense<0.000000e+00> : vector<8x128xf32>
    %14 = tpu.matmul %12, %13, %cst_8 {dimension_numbers = #tpu.dot_dimension_numbers<[1], [0], [0], [1], [0, 0, 1, 1], [], []>} : vector<8x128xbf16>, vector<128x128xbf16>, vector<8x128xf32> -> vector<8x128xf32>
    %15 = vector.broadcast %4 : vector<1x128xf32> to vector<8x128xf32>
    %16 = arith.addf %14, %15 : vector<8x128xf32>
    %cst_9 = arith.constant 0.000000e+00 : f32
    %17 = vector.broadcast %cst_9 : f32 to vector<8x128xf32>
    %18 = arith.maximumf %16, %17 : vector<8x128xf32>
    %19 = arith.truncf %18 : vector<8x128xf32> to vector<8x128xbf16>
    %c0_10 = arith.constant 0 : index
    %c0_11 = arith.constant 0 : index
    %20 = vector.load %arg4[%c0_10, %c0_11] : memref<128x8xbf16, #tpu.memory_space<vmem>>, vector<128x8xbf16>
    %cst_12 = arith.constant dense<0.000000e+00> : vector<8x8xf32>
    %21 = tpu.matmul %19, %20, %cst_12 {dimension_numbers = #tpu.dot_dimension_numbers<[1], [0], [0], [1], [0, 0, 1, 1], [], []>} : vector<8x128xbf16>, vector<128x8xbf16>, vector<8x8xf32> -> vector<8x8xf32>
    %22 = vector.broadcast %5 : vector<1x8xf32> to vector<8x8xf32>
    %23 = arith.addf %21, %22 : vector<8x8xf32>
    %c0_13 = arith.constant 0 : index
    %c0_14 = arith.constant 0 : index
    %24 = vector.load %arg6[%c0_13, %c0_14] : memref<8x8xf32, #tpu.memory_space<vmem>>, vector<8x8xf32>
    tpu.vector_store %arg6[%c0_13, %c0_14], %23 {strides = array<i32>} : memref<8x8xf32, #tpu.memory_space<vmem>>, vector<8x8xf32>,
    return
  }
  func.func @transform_0(%arg0: i32) -> (i32, i32) {
    %c0_i32 = arith.constant 0 : i32
    %c0_i32_0 = arith.constant 0 : i32
    return %arg0, %c0_i32 : i32, i32
  }
  func.func @transform_1(%arg0: i32) -> (i32, i32) {
    %c0_i32 = arith.constant 0 : i32
    %c0_i32_0 = arith.constant 0 : i32
    %c0_i32_1 = arith.constant 0 : i32
    return %c0_i32, %c0_i32_0 : i32, i32
  }
  func.func @transform_2(%arg0: i32) -> (i32, i32) {
    %c0_i32 = arith.constant 0 : i32
    %c0_i32_0 = arith.constant 0 : i32
    %c0_i32_1 = arith.constant 0 : i32
    return %c0_i32, %c0_i32_0 : i32, i32
  }
  func.func @transform_3(%arg0: i32) -> (i32, i32) {
    %c0_i32 = arith.constant 0 : i32
    %c0_i32_0 = arith.constant 0 : i32
    %c0_i32_1 = arith.constant 0 : i32
    return %c0_i32, %c0_i32_0 : i32, i32
  }
  func.func @transform_4(%arg0: i32) -> (i32, i32) {
    %c0_i32 = arith.constant 0 : i32
    %c0_i32_0 = arith.constant 0 : i32
    %c0_i32_1 = arith.constant 0 : i32
    return %c0_i32, %c0_i32_0 : i32, i32
  }
  func.func @transform_5(%arg0: i32) -> (i32, i32) {
    %c0_i32 = arith.constant 0 : i32
    %c0_i32_0 = arith.constant 0 : i32
    return %arg0, %c0_i32 : i32, i32
  }
}

</mosaic_0001>

<llo_original>
// kernel: tpu_custom_call.1
$region0: #{tpu_custom_call.1}
  #allocation0 [shape = 'u32[]', space=smem, size = 0x4, offset = 0x4, fixed_abs, tag = 'smem constant byte address 0x4 - core index']
  #allocation1 [shape = 'u32[144,128]{1,0:T(1,128)}', space=vmem, size = 0x12000, scoped, tag = 'internal scratch']
  %s0 = inlined_call_operand.hbm [shape: f32[8,16], index: 0, kind: input, shape index: {}]
  %s1 = inlined_call_operand.hbm [shape: bf16[16,128], index: 1, kind: input, shape index: {}]
  %s2 = inlined_call_operand.vmem [shape: bf16[128,128], index: 2, kind: input, shape index: {}]
  %s3 = inlined_call_operand.vmem [shape: bf16[128,8], index: 3, kind: input, shape index: {}]
  %s4 = inlined_call_operand.vmem [shape: f32[8,128], index: 4, kind: input, shape index: {}]
  %s5 = inlined_call_operand.hbm [shape: f32[8,8], index: 5, kind: output, shape index: {}]
  %s6 = sld [smem:[#allocation0]]
  $region38: #{tpu_custom_call.1} parent=0
    _
  %s8 = ssub.s32 1, %s6
  %s9 = scalar_select 0, %s8, %s6
  $region1: #{tpu_custom_call.1} parent=0
    #allocation2 [shape = 'u8[4096]{0}', space=vmem, size = 0x1000, scoped, tag = 'input window, operand 0, single buffered']
    #allocation3 [shape = 's32[1]{0}', space=sflag, size = 0x4, scoped, tag = 'scoped memory for tpu_custom_call.1']
    #allocation4 [shape = 's32[1]{0}', space=sflag, size = 0x4, scoped, tag = 'scoped memory for tpu_custom_call.1']
    #allocation5 [shape = 'u8[4096]{0}', space=vmem, size = 0x1000, scoped, tag = 'input window, operand 1, single buffered']
    #allocation6 [shape = 's32[1]{0}', space=sflag, size = 0x4, scoped, tag = 'scoped memory for tpu_custom_call.1']
    #allocation7 [shape = 'u8[4096]{0}', space=vmem, size = 0x1000, scoped, tag = 'output window, operand 0, single buffered']
    %10 = vsyncpa [#allocation3], 0
    %11 = vsyncpa [#allocation6], 0
    %12 = vsyncpa [#allocation4], 0
    // Predicated region
    $region2: #{tpu_custom_call.1} parent=1 // pred_check
      _
    $region3: #{tpu_custom_call.1} parent=1 // pred_check_branch
      %14 = sbr.rel (0) target = $region5
    $region4: #{tpu_custom_call.1} parent=1 // pred_region
      %s16 = ssub.s32 128, 128
      %17 = vsyncadd [#allocation3], %s16
      %s19 = sshll.u32 [#allocation2], 4
      %s20 = int_to_ptr.vmem [resolvable:$true] %s19
      %22 = dma.hbm_to_vmem [thread:$0]  %s0, 128, %s20, [#allocation3]
    $region5: #{tpu_custom_call.1} parent=1 // pred_fallthru
      _
    // Predicated region
    $region6: #{tpu_custom_call.1} parent=1 // pred_check
      _
    $region7: #{tpu_custom_call.1} parent=1 // pred_check_branch
      %24 = sbr.rel (0) target = $region9
    $region8: #{tpu_custom_call.1} parent=1 // pred_region
      %s26 = ssub.s32 128, 128
      %27 = vsyncadd [#allocation6], %s26
      %s28 = sshll.u32 [#allocation5], 4
      %s29 = int_to_ptr.vmem [resolvable:$true] %s28
      %34 = dma.hbm_to_vmem [thread:$0]  %s1, 128, %s29, [#allocation6], 64, 64, 4
    $region9: #{tpu_custom_call.1} parent=1 // pred_fallthru
      _
    // Predicated region
    $region10: #{tpu_custom_call.1} parent=1 // pred_check
      _
    $region11: #{tpu_custom_call.1} parent=1 // pred_check_branch
      %36 = sbr.rel (0) target = $region13
    $region12: #{tpu_custom_call.1} parent=1 // pred_region
      _
    $region13: #{tpu_custom_call.1} parent=1 // pred_fallthru
      _
    // Predicated region
    $region14: #{tpu_custom_call.1} parent=1 // pred_check
      _
    $region15: #{tpu_custom_call.1} parent=1 // pred_check_branch
      %38 = sbr.rel (0) target = $region17
    $region16: #{tpu_custom_call.1} parent=1 // pred_region
      _
    $region17: #{tpu_custom_call.1} parent=1 // pred_fallthru
      _
    // Predicated region
    $region18: #{tpu_custom_call.1} parent=1 // pred_check
      _
    $region19: #{tpu_custom_call.1} parent=1 // pred_check_branch
      %40 = sbr.rel (0) target = $region21
    $region20: #{tpu_custom_call.1} parent=1 // pred_region
      _
    $region21: #{tpu_custom_call.1} parent=1 // pred_fallthru
      _
    // Predicated region
    $region22: #{tpu_custom_call.1} parent=1 // pred_check
      _
    $region23: #{tpu_custom_call.1} parent=1 // pred_check_branch
      %42 = sbr.rel (0) target = $region25
    $region24: #{tpu_custom_call.1} parent=1 // pred_region
      %43 = dma.done [#allocation3], 128
    $region25: #{tpu_custom_call.1} parent=1 // pred_fallthru
      _
    // Predicated region
    $region26: #{tpu_custom_call.1} parent=1 // pred_check
      _
    $region27: #{tpu_custom_call.1} parent=1 // pred_check_branch
      %45 = sbr.rel (0) target = $region29
    $region28: #{tpu_custom_call.1} parent=1 // pred_region
      %46 = dma.done [#allocation6], 128
    $region29: #{tpu_custom_call.1} parent=1 // pred_fallthru
      _
    %v48 = vld [vmem:[#allocation2] sm:$0xff]
    %v49 = vpack.c.bf16 %v48, %v48
    %v50 = vld [vmem:[%s4] sm:$0xff]
    %v51 = vld [vmem:[#allocation5] sm:$0xf]
    %v52 = vld [vmem:[#allocation5 + $0x4] sm:$0xf]
    %v53 = vlaneseq
    %v54 = vshrl.u32 %v53, 7
    %v55 = vsub.s32 0, %v54
    %v56 = vrot.slane %v50, %v55
    %v59 = vunpack.c.l.b16 %v51
    %v60 = vunpack.c.l.b16 %v52
    %v61 = vpack.c.b16 %v60, %v59
    %vm63 = vcmask 130048
    %v65 = vsel %vm63, %v49, 0
    %67 = vmatprep.subr.bf16.mxu0 0
    %68 = vmatpush1.bf16.msra.mxu0 0
    %69 = vmatprep.subr.bf16.mxu0 0
    %70 = vmatpush1.bf16.msra.mxu0 0
    %71 = vmatprep.subr.bf16.mxu0 0
    %72 = vmatpush1.bf16.msra.mxu0 0
    %73 = vmatprep.subr.bf16.mxu0 0
    %74 = vmatpush1.bf16.msra.mxu0 0
    %75 = vmatprep.subr.bf16.mxu0 0
    %76 = vmatpush1.bf16.msra.mxu0 0
    %77 = vmatprep.subr.bf16.mxu0 0
    %78 = vmatpush1.bf16.msra.mxu0 0
    %79 = vmatprep.subr.bf16.mxu0 0
    %80 = vmatpush1.bf16.msra.mxu0 0
    %81 = vmatprep.subr.bf16.mxu0 0
    %82 = vmatpush1.bf16.msra.mxu0 %v61
    %83 = vmatprep.subr.bf16.mxu0 0
    %84 = vmatpush2.bf16.msra.mxu0 0
    %85 = vmatprep.subr.bf16.mxu0 0
    %86 = vmatpush2.bf16.msra.mxu0 0
    %87 = vmatprep.subr.bf16.mxu0 0
    %88 = vmatpush2.bf16.msra.mxu0 0
    %89 = vmatprep.subr.bf16.mxu0 0
    %90 = vmatpush2.bf16.msra.mxu0 0
    %91 = vmatprep.subr.bf16.mxu0 0
    %92 = vmatpush2.bf16.msra.mxu0 0
    %93 = vmatprep.subr.bf16.mxu0 0
    %94 = vmatpush2.bf16.msra.mxu0 0
    %95 = vmatprep.subr.bf16.mxu0 0
    %96 = vmatpush2.bf16.msra.mxu0 0
    %97 = vmatprep.subr.bf16.mxu0 0
    %98 = vmatpush2.bf16.msra.mxu0 0
    %99 = vmatprep.mubr.bf16.mxu0 0
    %100 = vmatmul.mubr.bf16.gmra.mxu0 %v65
    %v101 = vpop.f32.mrf.mxu0
    %v102 = vadd.f32 %v56, %v101
    %v103 = vpop.f32.mrf.mxu0
    %v104 = vpop.f32.mrf.mxu0
    %v105 = vpop.f32.mrf.mxu0
    %106 = vdwg.mxu0
    %v107 = vmax.f32 %v102, 0.0
    %v108 = vpack.c.bf16 %v107, %v107
    %v109 = vld [vmem:[%s2] sm:$0xf]
    %v110 = vld [vmem:[%s2 + $0x4] sm:$0xf]
    %v111 = vld [vmem:[%s2 + $0x8] sm:$0xf]
    %v112 = vld [vmem:[%s2 + $0xc] sm:$0xf]
    %v113 = vld [vmem:[%s2 + $0x10] sm:$0xf]
    %v114 = vld [vmem:[%s2 + $0x14] sm:$0xf]
    %v115 = vld [vmem:[%s2 + $0x18] sm:$0xf]
    %v116 = vld [vmem:[%s2 + $0x1c] sm:$0xf]
    %v117 = vld [vmem:[%s2 + $0x20] sm:$0xf]
    %v118 = vld [vmem:[%s2 + $0x24] sm:$0xf]
    %v119 = vld [vmem:[%s2 + $0x28] sm:$0xf]
    %v120 = vld [vmem:[%s2 + $0x2c] sm:$0xf]
    %v121 = vld [vmem:[%s2 + $0x30] sm:$0xf]
    %v122 = vld [vmem:[%s2 + $0x34] sm:$0xf]
    %v123 = vld [vmem:[%s2 + $0x38] sm:$0xf]
    %v124 = vld [vmem:[%s2 + $0x3c] sm:$0xf]
    %v125 = vlaneseq
    %v126 = vshrl.u32 %v125, 7
    %v127 = vsub.s32 1, %v126
    %v128 = vrot.slane %v50, %v127
    %v145 = vunpack.c.l.b16 %v109
    %v146 = vunpack.c.l.b16 %v110
    %v147 = vunpack.c.l.b16 %v111
    %v148 = vunpack.c.l.b16 %v112
    %v149 = vunpack.c.l.b16 %v113
    %v150 = vunpack.c.l.b16 %v114
    %v151 = vunpack.c.l.b16 %v115
    %v152 = vunpack.c.l.b16 %v116
    %v153 = vunpack.c.l.b16 %v117
    %v154 = vunpack.c.l.b16 %v118
    %v155 = vunpack.c.l.b16 %v119
    %v156 = vunpack.c.l.b16 %v120
    %v157 = vunpack.c.l.b16 %v121
    %v158 = vunpack.c.l.b16 %v122
    %v159 = vunpack.c.l.b16 %v123
    %v160 = vunpack.c.l.b16 %v124
    %v161 = vpack.c.b16 %v146, %v145
    %v162 = vpack.c.b16 %v148, %v147
    %v163 = vpack.c.b16 %v150, %v149
    %v164 = vpack.c.b16 %v152, %v151
    %v165 = vpack.c.b16 %v154, %v153
    %v166 = vpack.c.b16 %v156, %v155
    %v167 = vpack.c.b16 %v158, %v157
    %v168 = vpack.c.b16 %v160, %v159
    %177 = vmatprep.subr.bf16.mxu0 0
    %178 = vmatpush1.bf16.msra.mxu0 %v168
    %179 = vmatprep.subr.bf16.mxu0 0
    %180 = vmatpush1.bf16.msra.mxu0 %v167
    %181 = vmatprep.subr.bf16.mxu0 0
    %182 = vmatpush1.bf16.msra.mxu0 %v166
    %183 = vmatprep.subr.bf16.mxu0 0
    %184 = vmatpush1.bf16.msra.mxu0 %v165
    %185 = vmatprep.subr.bf16.mxu0 0
    %186 = vmatpush1.bf16.msra.mxu0 %v164
    %187 = vmatprep.subr.bf16.mxu0 0
    %188 = vmatpush1.bf16.msra.mxu0 %v163
    %189 = vmatprep.subr.bf16.mxu0 0
    %190 = vmatpush1.bf16.msra.mxu0 %v162
    %191 = vmatprep.subr.bf16.mxu0 0
    %192 = vmatpush1.bf16.msra.mxu0 %v161
    %193 = vmatprep.subr.bf16.mxu0 0
    %194 = vmatpush2.bf16.msra.mxu0 0
    %195 = vmatprep.subr.bf16.mxu0 0
    %196 = vmatpush2.bf16.msra.mxu0 0
    %197 = vmatprep.subr.bf16.mxu0 0
    %198 = vmatpush2.bf16.msra.mxu0 0
    %199 = vmatprep.subr.bf16.mxu0 0
    %200 = vmatpush2.bf16.msra.mxu0 0
    %201 = vmatprep.subr.bf16.mxu0 0
    %202 = vmatpush2.bf16.msra.mxu0 0
    %203 = vmatprep.subr.bf16.mxu0 0
    %204 = vmatpush2.bf16.msra.mxu0 0
    %205 = vmatprep.subr.bf16.mxu0 0
    %206 = vmatpush2.bf16.msra.mxu0 0
    %207 = vmatprep.subr.bf16.mxu0 0
    %208 = vmatpush2.bf16.msra.mxu0 0
    %209 = vmatprep.mubr.bf16.mxu0 0
    %210 = vmatmul.mubr.bf16.gmra.mxu0 %v108
    %v211 = vpop.f32.mrf.mxu0
    %v212 = vadd.f32 %v128, %v211
    %v213 = vpop.f32.mrf.mxu0
    %v214 = vpop.f32.mrf.mxu0
    %v215 = vpop.f32.mrf.mxu0
    %216 = vdwg.mxu0
    %v217 = vmax.f32 %v212, 0.0
    %v218 = vpack.c.bf16 %v217, %v217
    %v219 = vld [vmem:[%s3] sm:$0xf]
    %v220 = vld [vmem:[%s3 + $0x4] sm:$0xf]
    %v221 = vld [vmem:[%s3 + $0x8] sm:$0xf]
    %v222 = vld [vmem:[%s3 + $0xc] sm:$0xf]
    %v223 = vld [vmem:[%s3 + $0x10] sm:$0xf]
    %v224 = vld [vmem:[%s3 + $0x14] sm:$0xf]
    %v225 = vld [vmem:[%s3 + $0x18] sm:$0xf]
    %v226 = vld [vmem:[%s3 + $0x1c] sm:$0xf]
    %v227 = vld [vmem:[%s3 + $0x20] sm:$0xf]
    %v228 = vld [vmem:[%s3 + $0x24] sm:$0xf]
    %v229 = vld [vmem:[%s3 + $0x28] sm:$0xf]
    %v230 = vld [vmem:[%s3 + $0x2c] sm:$0xf]
    %v231 = vld [vmem:[%s3 + $0x30] sm:$0xf]
    %v232 = vld [vmem:[%s3 + $0x34] sm:$0xf]
    %v233 = vld [vmem:[%s3 + $0x38] sm:$0xf]
    %v234 = vld [vmem:[%s3 + $0x3c] sm:$0xf]
    %v235 = vlaneseq
    %v236 = vshrl.u32 %v235, 7
    %v237 = vsub.s32 2, %v236
    %v238 = vrot.slane %v50, %v237
    %v255 = vunpack.c.l.b16 %v219
    %v256 = vunpack.c.l.b16 %v220
    %v257 = vunpack.c.l.b16 %v221
    %v258 = vunpack.c.l.b16 %v222
    %v259 = vunpack.c.l.b16 %v223
    %v260 = vunpack.c.l.b16 %v224
    %v261 = vunpack.c.l.b16 %v225
    %v262 = vunpack.c.l.b16 %v226
    %v263 = vunpack.c.l.b16 %v227
    %v264 = vunpack.c.l.b16 %v228
    %v265 = vunpack.c.l.b16 %v229
    %v266 = vunpack.c.l.b16 %v230
    %v267 = vunpack.c.l.b16 %v231
    %v268 = vunpack.c.l.b16 %v232
    %v269 = vunpack.c.l.b16 %v233
    %v270 = vunpack.c.l.b16 %v234
    %v271 = vpack.c.b16 %v256, %v255
    %v272 = vpack.c.b16 %v258, %v257
    %v273 = vpack.c.b16 %v260, %v259
    %v274 = vpack.c.b16 %v262, %v261
    %v275 = vpack.c.b16 %v264, %v263
    %v276 = vpack.c.b16 %v266, %v265
    %v277 = vpack.c.b16 %v268, %v267
    %v278 = vpack.c.b16 %v270, %v269
    %287 = vmatprep.subr.bf16.mxu0 0
    %288 = vmatpush1.bf16.msra.mxu0 %v278
    %289 = vmatprep.subr.bf16.mxu0 0
    %290 = vmatpush1.bf16.msra.mxu0 %v277
    %291 = vmatprep.subr.bf16.mxu0 0
    %292 = vmatpush1.bf16.msra.mxu0 %v276
    %293 = vmatprep.subr.bf16.mxu0 0
    %294 = vmatpush1.bf16.msra.mxu0 %v275
    %295 = vmatprep.subr.bf16.mxu0 0
    %296 = vmatpush1.bf16.msra.mxu0 %v274
    %297 = vmatprep.subr.bf16.mxu0 0
    %298 = vmatpush1.bf16.msra.mxu0 %v273
    %299 = vmatprep.subr.bf16.mxu0 0
    %300 = vmatpush1.bf16.msra.mxu0 %v272
    %301 = vmatprep.subr.bf16.mxu0 0
    %302 = vmatpush1.bf16.msra.mxu0 %v271
    %303 = vmatprep.subr.bf16.mxu0 0
    %304 = vmatpush2.bf16.msra.mxu0 0
    %305 = vmatprep.subr.bf16.mxu0 0
    %306 = vmatpush2.bf16.msra.mxu0 0
    %307 = vmatprep.subr.bf16.mxu0 0
    %308 = vmatpush2.bf16.msra.mxu0 0
    %309 = vmatprep.subr.bf16.mxu0 0
    %310 = vmatpush2.bf16.msra.mxu0 0
    %311 = vmatprep.subr.bf16.mxu0 0
    %312 = vmatpush2.bf16.msra.mxu0 0
    %313 = vmatprep.subr.bf16.mxu0 0
    %314 = vmatpush2.bf16.msra.mxu0 0
    %315 = vmatprep.subr.bf16.mxu0 0
    %316 = vmatpush2.bf16.msra.mxu0 0
    %317 = vmatprep.subr.bf16.mxu0 0
    %318 = vmatpush2.bf16.msra.mxu0 0
    %319 = vmatprep.mubr.bf16.mxu0 0
    %320 = vmatmul.mubr.bf16.gmra.mxu0 %v218
    %v321 = vpop.f32.mrf.mxu0
    %v322 = vadd.f32 %v238, %v321
    %v323 = vpop.f32.mrf.mxu0
    %v324 = vpop.f32.mrf.mxu0
    %v325 = vpop.f32.mrf.mxu0
    %326 = vdwg.mxu0
    %vm327 = vcmask 64512
    %328 = vst.msk [vmem:[#allocation7] sm:$0xff] %vm327, %v322
    // Predicated region
    $region30: #{tpu_custom_call.1} parent=1 // pred_check
      _
    $region31: #{tpu_custom_call.1} parent=1 // pred_check_branch
      %330 = sbr.rel (0) target = $region33
    $region32: #{tpu_custom_call.1} parent=1 // pred_region
      %s332 = ssub.s32 128, 128
      %333 = vsyncadd [#allocation4], %s332
      %s335 = sshll.u32 [#allocation7], 4
      %s336 = int_to_ptr.vmem [resolvable:$true] %s335
      %338 = dma.vmem_to_hbm [thread:$0]  %s336, 128, %s5, [#allocation4]
    $region33: #{tpu_custom_call.1} parent=1 // pred_fallthru
      _
    // Predicated region
    $region34: #{tpu_custom_call.1} parent=1 // pred_check
      _
    $region35: #{tpu_custom_call.1} parent=1 // pred_check_branch
      %340 = sbr.rel (0) target = $region37
    $region36: #{tpu_custom_call.1} parent=1 // pred_region
      %341 = dma.done [#allocation4], 128
    $region37: #{tpu_custom_call.1} parent=1 // pred_fallthru
      _
    %342 = vsyncpa [#allocation3], 1
    %343 = vsyncpa [#allocation6], 1
    %344 = vsyncpa [#allocation4], 1

</llo_original>
